<compile_context>
chip_gen: v7x
topology: tpu7x:2x2x1
jax: 0.10.0
libtpu: 0.0.40
codegen_flags: <defaults>
</compile_context>

<pallas_src>
import jax
import jax.numpy as jnp
from jax.experimental import pallas as pl
from jax.experimental.pallas import tpu as pltpu

NEG_SLOPE = 0.01          # nn.LeakyReLU() default negative_slope
HIDDEN1 = 256
HIDDEN2 = 100
FEAT_PAD = 128            # 100 -> 128 lanes (one full vreg lane width)

_VMEM_BUDGET = 40 * (1 << 20)      # working-set target (headroom under v7x 64 MiB)
_VMEM_LIMIT_CAP = 60 * (1 << 20)   # never ask for more than ~physical v7x VMEM
_TN_CAP = 4096                     # max head-slab N tile (streams whp when wider)


def _leaky_relu(x):
    return jnp.where(x > 0, x, NEG_SLOPE * x)


def _round_up(n, m):
    return ((n + m - 1) // m) * m


def _cdiv(a, b):
    return (a + b - 1) // b


# ---------------------------------------------------------------- kernel ----

def _classifier_kernel(x_ref, w1_ref, b1_ref, w2_ref, b2_ref, wh_ref, bh_ref,
                       feat_ref, slab_ref, h2_ref):
    """Grid = (batch tiles i, head/N tiles j).

    The MLP trunk runs once per batch tile (j == 0) into the VMEM scratch
    `h2_ref`; every j step does one lane-dense head matmul on a (128, TN)
    weight block.
    """
    j = pl.program_id(1)

    @pl.when(j == 0)
    def _():
        x = x_ref[...].astype(jnp.float32)
        # layer1: Linear(in_nodes, 256) + LeakyReLU
        h1 = jnp.dot(x, w1_ref[...], preferred_element_type=jnp.float32) + b1_ref[...]
        h1 = _leaky_relu(h1)
        # layer2: Linear(256, 128-padded) + LeakyReLU -> feat tile
        h2 = jnp.dot(h1, w2_ref[...], preferred_element_type=jnp.float32) + b2_ref[...]
        h2 = _leaky_relu(h2)
        h2_ref[...] = h2
        feat_ref[...] = h2.astype(feat_ref.dtype)

    # fused heads: (TB,128) @ (128,TN) + bias -> lane-dense store
    h2 = h2_ref[...]
    slab = jnp.dot(h2, wh_ref[...], preferred_element_type=jnp.float32) + bh_ref[...]
    slab_ref[...] = slab.astype(slab_ref.dtype)


# ------------------------------------------------------------- parameters ---

def init_params(key, in_nodes, head_sizes):
    """Deterministic synthetic parameter init (stand-in for initialize_weights)."""
    def linear(key, fan_in, fan_out):
        kw, kb = jax.random.split(key)
        scale = (2.0 / fan_in) ** 0.5
        w = scale * jax.random.normal(kw, (fan_in, fan_out), dtype=jnp.float32)
        b = 0.01 * jax.random.normal(kb, (1, fan_out), dtype=jnp.float32)
        return w, b

    keys = jax.random.split(key, 2 + len(head_sizes))
    w1, b1 = linear(keys[0], in_nodes, HIDDEN1)
    w2, b2 = linear(keys[1], HIDDEN1, HIDDEN2)
    heads = []
    for i, h in enumerate(head_sizes):
        wh, bh = linear(keys[2 + i], HIDDEN2, h)
        heads.append((wh, bh))
    return (w1, b1, w2, b2, heads)


def prepare_params(params, head_sizes):
    """One-time padding / concatenation into lane-dense, kernel-ready arrays."""
    w1, b1, w2, b2, heads = params

    # Pad layer2 output dim 100 -> 128 (zeros; LeakyReLU(0)=0 keeps pads zero).
    w2p = jnp.zeros((HIDDEN1, FEAT_PAD), jnp.float32).at[:, :HIDDEN2].set(w2)
    b2p = jnp.zeros((1, FEAT_PAD), jnp.float32).at[:, :HIDDEN2].set(b2)

    # Concatenate head weights: (100, sum_h) -> pad K to 128, N to mult of 128.
    wh_cat = jnp.concatenate([wh for wh, _ in heads], axis=1)
    bh_cat = jnp.concatenate([bh for _, bh in heads], axis=1)
    sum_h = sum(head_sizes)
    n_pad = _round_up(max(sum_h, 1), 128)
    whp = jnp.zeros((FEAT_PAD, n_pad), jnp.float32).at[:HIDDEN2, :sum_h].set(wh_cat)
    bhp = jnp.zeros((1, n_pad), jnp.float32).at[:, :sum_h].set(bh_cat)

    offsets, off = [], 0
    for h in head_sizes:
        offsets.append(off)
        off += h
    return dict(w1=w1, b1=b1, w2p=w2p, b2p=b2p, whp=whp, bhp=bhp,
                n_pad=n_pad, offsets=tuple(offsets))


# ----------------------------------------------------------------- tiling ---

def _pick_tn(n_pad):
    """Largest 128-multiple divisor of n_pad that is <= _TN_CAP."""
    best, d = 128, 128
    while d <= min(n_pad, _TN_CAP):
        if n_pad % d == 0:
            best = d
        d += 128
    return best


def _workset_bytes(tb, tn, in_nodes):
    """Conservative double-buffered VMEM working set in bytes (f32 streams)."""
    f = 4
    ws = 2 * tb * in_nodes * f                 # x tile (double-buffered)
    ws += 2 * tb * FEAT_PAD * f                # feat output tile
    ws += 2 * tb * tn * f                      # head-slab output tile
    ws += tb * FEAT_PAD * f                    # h2 scratch
    # Weights counted at 2 buffers each — holds even if Buffered(1) is ignored.
    ws += 2 * (in_nodes * HIDDEN1 + HIDDEN1 + HIDDEN1 * FEAT_PAD + FEAT_PAD) * f
    ws += 2 * (FEAT_PAD * tn + tn) * f
    return ws


def _pick_tb(b8, tn, in_nodes):
    """Largest batch tile (<= 1024, multiple of 8) whose working set fits."""
    tb = 8
    for cand in (1024, 512, 384, 256, 128, 64, 32, 16, 8):
        if cand > b8:
            continue
        if _workset_bytes(cand, tn, in_nodes) <= _VMEM_BUDGET:
            tb = cand
            break
    # Guarantee >= 2 batch grid steps when the batch allows it, so the
    # "parallel" axis occupies both v7x TensorCores (no-op on v5e/v6e).
    if b8 == tb and b8 >= 16:
        tb = _round_up(_cdiv(b8, 2), 8)
    return tb


# ---------------------------------------------------------------- wrapper ---

def multi_head_classifier(x, prep, head_sizes):
    """x: (B, C, 1, 1) or (B, C).  Returns (features (B,100), [head_i (B,h_i)])."""
    # torch.squeeze equivalent, robust to in_nodes==1.
    # TODO(synk): torch.squeeze would also drop a size-1 batch axis (B == 1);
    # we keep the batch axis and flatten trailing size-1 dims instead.
    x2d = x.reshape(x.shape[0], -1).astype(jnp.float32)
    B, in_nodes = x2d.shape

    n_pad = prep["n_pad"]
    offsets = prep["offsets"]

    TN = _pick_tn(n_pad)
    nn = n_pad // TN

    # Batch tiling without a wrapper-side padded copy of x whenever possible.
    if B % 8 == 0:
        B_k = B
        TB = _pick_tb(B, TN, in_nodes)
    else:
        b8 = _round_up(B, 8)
        TB = _pick_tb(b8, TN, in_nodes)
        if b8 <= TB:
            # Whole batch in one block: block dim == array dim is legal, no pad.
            B_k, TB = B, B
        else:
            # Large ragged batch: pad rows to a multiple of 8 (one extra copy).
            # TODO(synk): a masked tail store inside the kernel would avoid it.
            x2d = jnp.pad(x2d, ((0, b8 - B), (0, 0)))
            B_k = b8

    nb = _cdiv(B_k, TB)
    grid = (nb, nn)

    ws = _workset_bytes(TB, TN, in_nodes)
    vmem_limit = int(min(_VMEM_LIMIT_CAP,
                         max(32 * (1 << 20), int(ws * 1.5) + (1 << 20))))

    def _spec(shape, index_map, mode=None):
        if mode is None:
            return pl.BlockSpec(shape, index_map)
        return pl.BlockSpec(shape, index_map, pipeline_mode=mode)

    def _call(single_buffer_weights):
        wmode = pl.Buffered(1) if single_buffer_weights else None
        hmode = pl.Buffered(1) if (single_buffer_weights and nn == 1) else None
        in_specs = [
            _spec((TB, in_nodes), lambda i, j: (i, 0)),            # x (re-fetched only when i changes)
            _spec((in_nodes, HIDDEN1), lambda i, j: (0, 0), wmode),  # w1
            _spec((1, HIDDEN1), lambda i, j: (0, 0), wmode),         # b1
            _spec((HIDDEN1, FEAT_PAD), lambda i, j: (0, 0), wmode),  # w2 (padded)
            _spec((1, FEAT_PAD), lambda i, j: (0, 0), wmode),        # b2 (padded)
            _spec((FEAT_PAD, TN), lambda i, j: (0, j), hmode),       # fused head weights
            _spec((1, TN), lambda i, j: (0, j), hmode),              # fused head biases
        ]
        out_specs = (
            _spec((TB, FEAT_PAD), lambda i, j: (i, 0)),              # feat
            _spec((TB, TN), lambda i, j: (i, j)),                    # fused head slab
        )
        return pl.pallas_call(
            _classifier_kernel,
            out_shape=(jax.ShapeDtypeStruct((B_k, FEAT_PAD), jnp.float32),
                       jax.ShapeDtypeStruct((B_k, n_pad), jnp.float32)),
            grid=grid,
            in_specs=in_specs,
            out_specs=out_specs,
            scratch_shapes=[pltpu.VMEM((TB, FEAT_PAD), jnp.float32)],
            compiler_params=pltpu.CompilerParams(
                dimension_semantics=("parallel", "arbitrary"),
                vmem_limit_bytes=vmem_limit),
        )(x2d, prep["w1"], prep["b1"], prep["w2p"], prep["b2p"],
          prep["whp"], prep["bhp"])

    try:
        feat_pad, slab = _call(True)
    except Exception:
        # pipeline_mode / Buffered(1) unsupported on this jax build: the only
        # difference is the single-buffering hint, so retry without it.
        feat_pad, slab = _call(False)

    # Cheap XLA slices outside the kernel: strip padding, split heads.
    feat = feat_pad[:B, :HIDDEN2]
    outs = [slab[:B, off:off + h] for off, h in zip(offsets, head_sizes)]
    return feat, outs


# -------------------------------------------------------------- reference ---

def _reference(x, params):
    """Plain-JAX reference for correctness checking."""
    x2d = x.reshape(x.shape[0], -1).astype(jnp.float32)
    w1, b1, w2, b2, heads = params
    h1 = _leaky_relu(x2d @ w1 + b1)
    h2 = _leaky_relu(h1 @ w2 + b2)
    return h2, [h2 @ wh + bh for wh, bh in heads]


if __name__ == "__main__":
    B = 2
    in_nodes = 32
    head_sizes = [8, 16]

    key = jax.random.PRNGKey(0)
    k_x, k_p = jax.random.split(key)
    # conv-style (B, C, 1, 1) input, as implied by torch.squeeze in forward
    x = jax.random.normal(k_x, (B, in_nodes, 1, 1), dtype=jnp.float32)
    params = init_params(k_p, in_nodes, head_sizes)
    prep = prepare_params(params, head_sizes)   # one-time padding / fusion

    feat, outs = multi_head_classifier(x, prep, head_sizes)
    feat = jax.block_until_ready(feat)
    outs = [jax.block_until_ready(o) for o in outs]

    # sanity check against plain-JAX reference
    ref_feat, ref_outs = _reference(x, params)
    assert feat.shape == (B, HIDDEN2)
    assert jnp.allclose(feat, ref_feat, atol=1e-5, rtol=1e-5)
    for o, ro, h in zip(outs, ref_outs, head_sizes):
        assert o.shape == (B, h)
        assert jnp.allclose(o, ro, atol=1e-5, rtol=1e-5)

    print("KERNEL_OK")
</pallas_src>

<mosaic_0001>
module attributes {stable_mosaic.version = 11 : i64} {
  func.func @_classifier_kernel(%arg0: i32, %arg1: i32, %arg2: memref<2x32xf32, #tpu.memory_space<vmem>>, %arg3: memref<32x256xf32, #tpu.memory_space<vmem>>, %arg4: memref<1x256xf32, #tpu.memory_space<vmem>>, %arg5: memref<256x128xf32, #tpu.memory_space<vmem>>, %arg6: memref<1x128xf32, #tpu.memory_space<vmem>>, %arg7: memref<128x128xf32, #tpu.memory_space<vmem>>, %arg8: memref<1x128xf32, #tpu.memory_space<vmem>>, %arg9: memref<2x128xf32, #tpu.memory_space<vmem>>, %arg10: memref<2x128xf32, #tpu.memory_space<vmem>>, %arg11: memref<2x128xf32, #tpu.memory_space<vmem>>) attributes {dimension_semantics = [#tpu.dimension_semantics<parallel>, #tpu.dimension_semantics<arbitrary>], iteration_bounds = array<i64: 1, 1>, scalar_prefetch = 0 : i64, scratch_operands = 1 : i64, tpu.core_type = #tpu.core_type<tc>, window_params = [{transform_indices = @transform_0, window_bounds = array<i64: 2, 32>}, {pipeline_mode = #tpu.pipeline_mode<synchronous>, transform_indices = @transform_1, window_bounds = array<i64: 32, 256>}, {pipeline_mode = #tpu.pipeline_mode<synchronous>, transform_indices = @transform_2, window_bounds = array<i64: 1, 256>}, {pipeline_mode = #tpu.pipeline_mode<synchronous>, transform_indices = @transform_3, window_bounds = array<i64: 256, 128>}, {pipeline_mode = #tpu.pipeline_mode<synchronous>, transform_indices = @transform_4, window_bounds = array<i64: 1, 128>}, {pipeline_mode = #tpu.pipeline_mode<synchronous>, transform_indices = @transform_5, window_bounds = array<i64: 128, 128>}, {pipeline_mode = #tpu.pipeline_mode<synchronous>, transform_indices = @transform_6, window_bounds = array<i64: 1, 128>}, {transform_indices = @transform_7, window_bounds = array<i64: 2, 128>}, {transform_indices = @transform_8, window_bounds = array<i64: 2, 128>}]} {
    %c0_i32 = arith.constant 0 : i32
    %0 = arith.cmpi eq, %arg1, %c0_i32 : i32
    %1 = arith.extui %0 : i1 to i32
    %c0_i32_0 = arith.constant 0 : i32
    %2 = arith.cmpi ne, %1, %c0_i32_0 : i32
    scf.if %2 {
      %c0_8 = arith.constant 0 : index
      %c0_9 = arith.constant 0 : index
      %10 = vector.load %arg2[%c0_8, %c0_9] : memref<2x32xf32, #tpu.memory_space<vmem>>, vector<2x32xf32>
      %c0_10 = arith.constant 0 : index
      %c0_11 = arith.constant 0 : index
      %11 = vector.load %arg3[%c0_10, %c0_11] : memref<32x256xf32, #tpu.memory_space<vmem>>, vector<32x256xf32>
      %cst_12 = arith.constant dense<0.000000e+00> : vector<2x256xf32>
      %12 = tpu.matmul %10, %11, %cst_12 {dimension_numbers = #tpu.dot_dimension_numbers<[1], [0], [0], [1], [0, 0, 1, 1], [], []>} : vector<2x32xf32>, vector<32x256xf32>, vector<2x256xf32> -> vector<2x256xf32>
      %c0_13 = arith.constant 0 : index
      %c0_14 = arith.constant 0 : index
      %13 = vector.load %arg4[%c0_13, %c0_14] : memref<1x256xf32, #tpu.memory_space<vmem>>, vector<1x256xf32>
      %14 = vector.broadcast %13 : vector<1x256xf32> to vector<2x256xf32>
      %15 = arith.addf %12, %14 : vector<2x256xf32>
      %cst_15 = arith.constant 0.000000e+00 : f32
      %16 = vector.broadcast %cst_15 : f32 to vector<2x256xf32>
      %17 = arith.cmpf ogt, %15, %16 : vector<2x256xf32>
      %cst_16 = arith.constant 0.00999999977 : f32
      %18 = vector.broadcast %cst_16 : f32 to vector<2x256xf32>
      %19 = arith.mulf %18, %15 : vector<2x256xf32>
      %20 = arith.select %17, %15, %19 : vector<2x256xi1>, vector<2x256xf32>
      %c0_17 = arith.constant 0 : index
      %c0_18 = arith.constant 0 : index
      %21 = vector.load %arg5[%c0_17, %c0_18] : memref<256x128xf32, #tpu.memory_space<vmem>>, vector<256x128xf32>
      %cst_19 = arith.constant dense<0.000000e+00> : vector<2x128xf32>
      %22 = tpu.matmul %20, %21, %cst_19 {dimension_numbers = #tpu.dot_dimension_numbers<[1], [0], [0], [1], [0, 0, 1, 1], [], []>} : vector<2x256xf32>, vector<256x128xf32>, vector<2x128xf32> -> vector<2x128xf32>
      %c0_20 = arith.constant 0 : index
      %c0_21 = arith.constant 0 : index
      %23 = vector.load %arg6[%c0_20, %c0_21] : memref<1x128xf32, #tpu.memory_space<vmem>>, vector<1x128xf32>
      %24 = vector.broadcast %23 : vector<1x128xf32> to vector<2x128xf32>
      %25 = arith.addf %22, %24 : vector<2x128xf32>
      %cst_22 = arith.constant 0.000000e+00 : f32
      %26 = vector.broadcast %cst_22 : f32 to vector<2x128xf32>
      %27 = arith.cmpf ogt, %25, %26 : vector<2x128xf32>
      %cst_23 = arith.constant 0.00999999977 : f32
      %28 = vector.broadcast %cst_23 : f32 to vector<2x128xf32>
      %29 = arith.mulf %28, %25 : vector<2x128xf32>
      %30 = arith.select %27, %25, %29 : vector<2x128xi1>, vector<2x128xf32>
      %c0_24 = arith.constant 0 : index
      %c0_25 = arith.constant 0 : index
      %31 = vector.load %arg11[%c0_24, %c0_25] : memref<2x128xf32, #tpu.memory_space<vmem>>, vector<2x128xf32>
      tpu.vector_store %arg11[%c0_24, %c0_25], %30 {strides = array<i32>} : memref<2x128xf32, #tpu.memory_space<vmem>>, vector<2x128xf32>,
      %c0_26 = arith.constant 0 : index
      %c0_27 = arith.constant 0 : index
      %32 = vector.load %arg9[%c0_26, %c0_27] : memref<2x128xf32, #tpu.memory_space<vmem>>, vector<2x128xf32>
      tpu.vector_store %arg9[%c0_26, %c0_27], %30 {strides = array<i32>} : memref<2x128xf32, #tpu.memory_space<vmem>>, vector<2x128xf32>,
    } else {
    }
    %c0 = arith.constant 0 : index
    %c0_1 = arith.constant 0 : index
    %3 = vector.load %arg11[%c0, %c0_1] : memref<2x128xf32, #tpu.memory_space<vmem>>, vector<2x128xf32>
    %c0_2 = arith.constant 0 : index
    %c0_3 = arith.constant 0 : index
    %4 = vector.load %arg7[%c0_2, %c0_3] : memref<128x128xf32, #tpu.memory_space<vmem>>, vector<128x128xf32>
    %cst = arith.constant dense<0.000000e+00> : vector<2x128xf32>
    %5 = tpu.matmul %3, %4, %cst {dimension_numbers = #tpu.dot_dimension_numbers<[1], [0], [0], [1], [0, 0, 1, 1], [], []>} : vector<2x128xf32>, vector<128x128xf32>, vector<2x128xf32> -> vector<2x128xf32>
    %c0_4 = arith.constant 0 : index
    %c0_5 = arith.constant 0 : index
    %6 = vector.load %arg8[%c0_4, %c0_5] : memref<1x128xf32, #tpu.memory_space<vmem>>, vector<1x128xf32>
    %7 = vector.broadcast %6 : vector<1x128xf32> to vector<2x128xf32>
    %8 = arith.addf %5, %7 : vector<2x128xf32>
    %c0_6 = arith.constant 0 : index
    %c0_7 = arith.constant 0 : index
    %9 = vector.load %arg10[%c0_6, %c0_7] : memref<2x128xf32, #tpu.memory_space<vmem>>, vector<2x128xf32>
    tpu.vector_store %arg10[%c0_6, %c0_7], %8 {strides = array<i32>} : memref<2x128xf32, #tpu.memory_space<vmem>>, vector<2x128xf32>,
    return
  }
  func.func @transform_0(%arg0: i32, %arg1: i32) -> (i32, i32) {
    %c0_i32 = arith.constant 0 : i32
    %c0_i32_0 = arith.constant 0 : i32
    return %arg0, %c0_i32 : i32, i32
  }
  func.func @transform_1(%arg0: i32, %arg1: i32) -> (i32, i32) {
    %c0_i32 = arith.constant 0 : i32
    %c0_i32_0 = arith.constant 0 : i32
    %c0_i32_1 = arith.constant 0 : i32
    return %c0_i32, %c0_i32_0 : i32, i32
  }
  func.func @transform_2(%arg0: i32, %arg1: i32) -> (i32, i32) {
    %c0_i32 = arith.constant 0 : i32
    %c0_i32_0 = arith.constant 0 : i32
    %c0_i32_1 = arith.constant 0 : i32
    return %c0_i32, %c0_i32_0 : i32, i32
  }
  func.func @transform_3(%arg0: i32, %arg1: i32) -> (i32, i32) {
    %c0_i32 = arith.constant 0 : i32
    %c0_i32_0 = arith.constant 0 : i32
    %c0_i32_1 = arith.constant 0 : i32
    return %c0_i32, %c0_i32_0 : i32, i32
  }
  func.func @transform_4(%arg0: i32, %arg1: i32) -> (i32, i32) {
    %c0_i32 = arith.constant 0 : i32
    %c0_i32_0 = arith.constant 0 : i32
    %c0_i32_1 = arith.constant 0 : i32
    return %c0_i32, %c0_i32_0 : i32, i32
  }
  func.func @transform_5(%arg0: i32, %arg1: i32) -> (i32, i32) {
    %c0_i32 = arith.constant 0 : i32
    %c0_i32_0 = arith.constant 0 : i32
    return %c0_i32, %arg1 : i32, i32
  }
  func.func @transform_6(%arg0: i32, %arg1: i32) -> (i32, i32) {
    %c0_i32 = arith.constant 0 : i32
    %c0_i32_0 = arith.constant 0 : i32
    return %c0_i32, %arg1 : i32, i32
  }
  func.func @transform_7(%arg0: i32, %arg1: i32) -> (i32, i32) {
    %c0_i32 = arith.constant 0 : i32
    %c0_i32_0 = arith.constant 0 : i32
    return %arg0, %c0_i32 : i32, i32
  }
  func.func @transform_8(%arg0: i32, %arg1: i32) -> (i32, i32) {
    %c0_i32 = arith.constant 0 : i32
    return %arg0, %arg1 : i32, i32
  }
}

module attributes {stable_mosaic.version = 11 : i64} {
  func.func @_classifier_kernel(%arg0: i32, %arg1: i32, %arg2: memref<2x32xf32, #tpu.memory_space<vmem>>, %arg3: memref<32x256xf32, #tpu.memory_space<vmem>>, %arg4: memref<1x256xf32, #tpu.memory_space<vmem>>, %arg5: memref<256x128xf32, #tpu.memory_space<vmem>>, %arg6: memref<1x128xf32, #tpu.memory_space<vmem>>, %arg7: memref<128x128xf32, #tpu.memory_space<vmem>>, %arg8: memref<1x128xf32, #tpu.memory_space<vmem>>, %arg9: memref<2x128xf32, #tpu.memory_space<vmem>>, %arg10: memref<2x128xf32, #tpu.memory_space<vmem>>, %arg11: memref<2x128xf32, #tpu.memory_space<vmem>>) attributes {dimension_semantics = [#tpu.dimension_semantics<parallel>, #tpu.dimension_semantics<arbitrary>], iteration_bounds = array<i64: 1, 1>, scalar_prefetch = 0 : i64, scratch_operands = 1 : i64, tpu.core_type = #tpu.core_type<tc>, window_params = [{transform_indices = @transform_0, window_bounds = array<i64: 2, 32>}, {pipeline_mode = #tpu.pipeline_mode<synchronous>, transform_indices = @transform_1, window_bounds = array<i64: 32, 256>}, {pipeline_mode = #tpu.pipeline_mode<synchronous>, transform_indices = @transform_2, window_bounds = array<i64: 1, 256>}, {pipeline_mode = #tpu.pipeline_mode<synchronous>, transform_indices = @transform_3, window_bounds = array<i64: 256, 128>}, {pipeline_mode = #tpu.pipeline_mode<synchronous>, transform_indices = @transform_4, window_bounds = array<i64: 1, 128>}, {transform_indices = @transform_5, window_bounds = array<i64: 128, 128>}, {transform_indices = @transform_6, window_bounds = array<i64: 1, 128>}, {transform_indices = @transform_7, window_bounds = array<i64: 2, 128>}, {transform_indices = @transform_8, window_bounds = array<i64: 2, 128>}]} {
    %c0_i32 = arith.constant 0 : i32
    %0 = arith.cmpi eq, %arg1, %c0_i32 : i32
    %1 = arith.extui %0 : i1 to i32
    %c0_i32_0 = arith.constant 0 : i32
    %2 = arith.cmpi ne, %1, %c0_i32_0 : i32
    scf.if %2 {
      %c0_8 = arith.constant 0 : index
      %c0_9 = arith.constant 0 : index
      %10 = vector.load %arg2[%c0_8, %c0_9] : memref<2x32xf32, #tpu.memory_space<vmem>>, vector<2x32xf32>
      %c0_10 = arith.constant 0 : index
      %c0_11 = arith.constant 0 : index
      %11 = vector.load %arg3[%c0_10, %c0_11] : memref<32x256xf32, #tpu.memory_space<vmem>>, vector<32x256xf32>
      %cst_12 = arith.constant dense<0.000000e+00> : vector<2x256xf32>
      %12 = tpu.matmul %10, %11, %cst_12 {dimension_numbers = #tpu.dot_dimension_numbers<[1], [0], [0], [1], [0, 0, 1, 1], [], []>} : vector<2x32xf32>, vector<32x256xf32>, vector<2x256xf32> -> vector<2x256xf32>
      %c0_13 = arith.constant 0 : index
      %c0_14 = arith.constant 0 : index
      %13 = vector.load %arg4[%c0_13, %c0_14] : memref<1x256xf32, #tpu.memory_space<vmem>>, vector<1x256xf32>
      %14 = vector.broadcast %13 : vector<1x256xf32> to vector<2x256xf32>
      %15 = arith.addf %12, %14 : vector<2x256xf32>
      %cst_15 = arith.constant 0.000000e+00 : f32
      %16 = vector.broadcast %cst_15 : f32 to vector<2x256xf32>
      %17 = arith.cmpf ogt, %15, %16 : vector<2x256xf32>
      %cst_16 = arith.constant 0.00999999977 : f32
      %18 = vector.broadcast %cst_16 : f32 to vector<2x256xf32>
      %19 = arith.mulf %18, %15 : vector<2x256xf32>
      %20 = arith.select %17, %15, %19 : vector<2x256xi1>, vector<2x256xf32>
      %c0_17 = arith.constant 0 : index
      %c0_18 = arith.constant 0 : index
      %21 = vector.load %arg5[%c0_17, %c0_18] : memref<256x128xf32, #tpu.memory_space<vmem>>, vector<256x128xf32>
      %cst_19 = arith.constant dense<0.000000e+00> : vector<2x128xf32>
      %22 = tpu.matmul %20, %21, %cst_19 {dimension_numbers = #tpu.dot_dimension_numbers<[1], [0], [0], [1], [0, 0, 1, 1], [], []>} : vector<2x256xf32>, vector<256x128xf32>, vector<2x128xf32> -> vector<2x128xf32>
      %c0_20 = arith.constant 0 : index
      %c0_21 = arith.constant 0 : index
      %23 = vector.load %arg6[%c0_20, %c0_21] : memref<1x128xf32, #tpu.memory_space<vmem>>, vector<1x128xf32>
      %24 = vector.broadcast %23 : vector<1x128xf32> to vector<2x128xf32>
      %25 = arith.addf %22, %24 : vector<2x128xf32>
      %cst_22 = arith.constant 0.000000e+00 : f32
      %26 = vector.broadcast %cst_22 : f32 to vector<2x128xf32>
      %27 = arith.cmpf ogt, %25, %26 : vector<2x128xf32>
      %cst_23 = arith.constant 0.00999999977 : f32
      %28 = vector.broadcast %cst_23 : f32 to vector<2x128xf32>
      %29 = arith.mulf %28, %25 : vector<2x128xf32>
      %30 = arith.select %27, %25, %29 : vector<2x128xi1>, vector<2x128xf32>
      %c0_24 = arith.constant 0 : index
      %c0_25 = arith.constant 0 : index
      %31 = vector.load %arg11[%c0_24, %c0_25] : memref<2x128xf32, #tpu.memory_space<vmem>>, vector<2x128xf32>
      tpu.vector_store %arg11[%c0_24, %c0_25], %30 {strides = array<i32>} : memref<2x128xf32, #tpu.memory_space<vmem>>, vector<2x128xf32>,
      %c0_26 = arith.constant 0 : index
      %c0_27 = arith.constant 0 : index
      %32 = vector.load %arg9[%c0_26, %c0_27] : memref<2x128xf32, #tpu.memory_space<vmem>>, vector<2x128xf32>
      tpu.vector_store %arg9[%c0_26, %c0_27], %30 {strides = array<i32>} : memref<2x128xf32, #tpu.memory_space<vmem>>, vector<2x128xf32>,
    } else {
    }
    %c0 = arith.constant 0 : index
    %c0_1 = arith.constant 0 : index
    %3 = vector.load %arg11[%c0, %c0_1] : memref<2x128xf32, #tpu.memory_space<vmem>>, vector<2x128xf32>
    %c0_2 = arith.constant 0 : index
    %c0_3 = arith.constant 0 : index
    %4 = vector.load %arg7[%c0_2, %c0_3] : memref<128x128xf32, #tpu.memory_space<vmem>>, vector<128x128xf32>
    %cst = arith.constant dense<0.000000e+00> : vector<2x128xf32>
    %5 = tpu.matmul %3, %4, %cst {dimension_numbers = #tpu.dot_dimension_numbers<[1], [0], [0], [1], [0, 0, 1, 1], [], []>} : vector<2x128xf32>, vector<128x128xf32>, vector<2x128xf32> -> vector<2x128xf32>
    %c0_4 = arith.constant 0 : index
    %c0_5 = arith.constant 0 : index
    %6 = vector.load %arg8[%c0_4, %c0_5] : memref<1x128xf32, #tpu.memory_space<vmem>>, vector<1x128xf32>
    %7 = vector.broadcast %6 : vector<1x128xf32> to vector<2x128xf32>
    %8 = arith.addf %5, %7 : vector<2x128xf32>
    %c0_6 = arith.constant 0 : index
    %c0_7 = arith.constant 0 : index
    %9 = vector.load %arg10[%c0_6, %c0_7] : memref<2x128xf32, #tpu.memory_space<vmem>>, vector<2x128xf32>
    tpu.vector_store %arg10[%c0_6, %c0_7], %8 {strides = array<i32>} : memref<2x128xf32, #tpu.memory_space<vmem>>, vector<2x128xf32>,
    return
  }
  func.func @transform_0(%arg0: i32, %arg1: i32) -> (i32, i32) {
    %c0_i32 = arith.constant 0 : i32
    %c0_i32_0 = arith.constant 0 : i32
    return %arg0, %c0_i32 : i32, i32
  }
  func.func @transform_1(%arg0: i32, %arg1: i32) -> (i32, i32) {
    %c0_i32 = arith.constant 0 : i32
    %c0_i32_0 = arith.constant 0 : i32
    %c0_i32_1 = arith.constant 0 : i32
    return %c0_i32, %c0_i32_0 : i32, i32
  }
  func.func @transform_2(%arg0: i32, %arg1: i32) -> (i32, i32) {
    %c0_i32 = arith.constant 0 : i32
    %c0_i32_0 = arith.constant 0 : i32
    %c0_i32_1 = arith.constant 0 : i32
    return %c0_i32, %c0_i32_0 : i32, i32
  }
  func.func @transform_3(%arg0: i32, %arg1: i32) -> (i32, i32) {
    %c0_i32 = arith.constant 0 : i32
    %c0_i32_0 = arith.constant 0 : i32
    %c0_i32_1 = arith.constant 0 : i32
    return %c0_i32, %c0_i32_0 : i32, i32
  }
  func.func @transform_4(%arg0: i32, %arg1: i32) -> (i32, i32) {
    %c0_i32 = arith.constant 0 : i32
    %c0_i32_0 = arith.constant 0 : i32
    %c0_i32_1 = arith.constant 0 : i32
    return %c0_i32, %c0_i32_0 : i32, i32
  }
  func.func @transform_5(%arg0: i32, %arg1: i32) -> (i32, i32) {
    %c0_i32 = arith.constant 0 : i32
    %c0_i32_0 = arith.constant 0 : i32
    return %c0_i32, %arg1 : i32, i32
  }
  func.func @transform_6(%arg0: i32, %arg1: i32) -> (i32, i32) {
    %c0_i32 = arith.constant 0 : i32
    %c0_i32_0 = arith.constant 0 : i32
    return %c0_i32, %arg1 : i32, i32
  }
  func.func @transform_7(%arg0: i32, %arg1: i32) -> (i32, i32) {
    %c0_i32 = arith.constant 0 : i32
    %c0_i32_0 = arith.constant 0 : i32
    return %arg0, %c0_i32 : i32, i32
  }
  func.func @transform_8(%arg0: i32, %arg1: i32) -> (i32, i32) {
    %c0_i32 = arith.constant 0 : i32
    return %arg0, %arg1 : i32, i32
  }
}

</mosaic_0001>

<llo_original>
// kernel: tpu_custom_call.1
$region0: #{tpu_custom_call.1}
  #allocation0 [shape = 'u32[]', space=smem, size = 0x4, offset = 0x4, fixed_abs, tag = 'smem constant byte address 0x4 - core index']
  #allocation1 [shape = 'u32[144,128]{1,0:T(1,128)}', space=vmem, size = 0x12000, scoped, tag = 'internal scratch']
  #allocation2 [shape = 'f32[2,128]{1,0:T(2,128)}', space=vmem, size = 0x400, scoped, tag = 'scratch operand']
  %s0 = inlined_call_operand.hbm [shape: f32[2,32], index: 0, kind: input, shape index: {}]
  %s1 = inlined_call_operand.hbm [shape: f32[32,256], index: 1, kind: input, shape index: {}]
  %s2 = inlined_call_operand.vmem [shape: f32[1,256], index: 2, kind: input, shape index: {}]
  %s3 = inlined_call_operand.hbm [shape: f32[256,128], index: 3, kind: input, shape index: {}]
  %s4 = inlined_call_operand.vmem [shape: f32[1,128], index: 4, kind: input, shape index: {}]
  %s5 = inlined_call_operand.hbm [shape: f32[128,128], index: 5, kind: input, shape index: {}]
  %s6 = inlined_call_operand.vmem [shape: f32[1,128], index: 6, kind: input, shape index: {}]
  %s7 = inlined_call_operand.hbm [shape: f32[2,128], index: 7, kind: output, shape index: {0}]
  %s8 = inlined_call_operand.hbm [shape: f32[2,128], index: 8, kind: output, shape index: {1}]
  %9 = xla_tuple %s7, %s8
  %s10 = sld [smem:[#allocation0]]
  $region66: #{tpu_custom_call.1} parent=0
    _
  %s12 = ssub.s32 1, %s10
  %s13 = scalar_select 0, %s12, %s10
  $region1: #{tpu_custom_call.1} parent=0
    #allocation3 [shape = 'u8[1024]{0}', space=vmem, size = 0x400, scoped, tag = 'input window, operand 0, single buffered']
    #allocation4 [shape = 's32[1]{0}', space=sflag, size = 0x4, scoped, tag = 'scoped memory for tpu_custom_call.1']
    #allocation5 [shape = 's32[1]{0}', space=sflag, size = 0x4, scoped, tag = 'scoped memory for tpu_custom_call.1']
    #allocation6 [shape = 'u8[32768]{0}', space=vmem, size = 0x8000, scoped, tag = 'input window, operand 1, single buffered']
    #allocation7 [shape = 's32[1]{0}', space=sflag, size = 0x4, scoped, tag = 'scoped memory for tpu_custom_call.1']
    #allocation8 [shape = 'u8[131072]{0}', space=vmem, size = 0x20000, scoped, tag = 'input window, operand 3, single buffered']
    #allocation9 [shape = 'u8[65536]{0}', space=vmem, size = 0x10000, scoped, tag = 'input window, operand 5, single buffered']
    #allocation10 [shape = 's32[1]{0}', space=sflag, size = 0x4, scoped, tag = 'scoped memory for tpu_custom_call.1']
    #allocation11 [shape = 'u8[1024]{0}', space=vmem, size = 0x400, scoped, tag = 'output window, operand 0, single buffered']
    #allocation12 [shape = 'u8[1024]{0}', space=vmem, size = 0x400, scoped, tag = 'output window, operand 1, single buffered']
    #allocation13 [shape = 's32[1]{0}', space=sflag, size = 0x4, scoped, tag = 'scoped memory for tpu_custom_call.1']
    %14 = vsyncpa [#allocation4], 0
    %15 = vsyncpa [#allocation7], 0
    %16 = vsyncpa [#allocation10], 0
    %17 = vsyncpa [#allocation5], 0
    %18 = vsyncpa [#allocation13], 0
    // Predicated region
    $region2: #{tpu_custom_call.1} parent=1 // pred_check
      _
    $region3: #{tpu_custom_call.1} parent=1 // pred_check_branch
      %20 = sbr.rel (0) target = $region5
    $region4: #{tpu_custom_call.1} parent=1 // pred_region
      %s22 = ssub.s32 32, 32
      %23 = vsyncadd [#allocation4], %s22
      %s25 = sshll.u32 [#allocation3], 4
      %s26 = int_to_ptr.vmem [resolvable:$true] %s25
      %28 = dma.hbm_to_vmem [thread:$0]  %s0, 32, %s26, [#allocation4]
    $region5: #{tpu_custom_call.1} parent=1 // pred_fallthru
      _
    // Predicated region
    $region6: #{tpu_custom_call.1} parent=1 // pred_check
      _
    $region7: #{tpu_custom_call.1} parent=1 // pred_check_branch
      %30 = sbr.rel (0) target = $region9
    $region8: #{tpu_custom_call.1} parent=1 // pred_region
      %s32 = ssub.s32 1024, 1024
      %33 = vsyncadd [#allocation7], %s32
      %s34 = sshll.u32 [#allocation6], 4
      %s35 = int_to_ptr.vmem [resolvable:$true] %s34
      %40 = dma.hbm_to_vmem [thread:$0]  %s1, 1024, %s35, [#allocation7], 256, 256, 16
    $region9: #{tpu_custom_call.1} parent=1 // pred_fallthru
      _
    // Predicated region
    $region10: #{tpu_custom_call.1} parent=1 // pred_check
      _
    $region11: #{tpu_custom_call.1} parent=1 // pred_check_branch
      %42 = sbr.rel (0) target = $region13
    $region12: #{tpu_custom_call.1} parent=1 // pred_region
      _
    $region13: #{tpu_custom_call.1} parent=1 // pred_fallthru
      _
    // Predicated region
    $region14: #{tpu_custom_call.1} parent=1 // pred_check
      _
    $region15: #{tpu_custom_call.1} parent=1 // pred_check_branch
      %44 = sbr.rel (0) target = $region17
    $region16: #{tpu_custom_call.1} parent=1 // pred_region
      %s46 = ssub.s32 4096, 4096
      %47 = vsyncadd [#allocation7], %s46
      %s48 = sshll.u32 [#allocation8], 4
      %s49 = int_to_ptr.vmem [resolvable:$true] %s48
      %54 = dma.hbm_to_vmem [thread:$0]  %s3, 4096, %s49, [#allocation7], 128, 128, 8
    $region17: #{tpu_custom_call.1} parent=1 // pred_fallthru
      _
    // Predicated region
    $region18: #{tpu_custom_call.1} parent=1 // pred_check
      _
    $region19: #{tpu_custom_call.1} parent=1 // pred_check_branch
      %56 = sbr.rel (0) target = $region21
    $region20: #{tpu_custom_call.1} parent=1 // pred_region
      _
    $region21: #{tpu_custom_call.1} parent=1 // pred_fallthru
      _
    // Predicated region
    $region22: #{tpu_custom_call.1} parent=1 // pred_check
      _
    $region23: #{tpu_custom_call.1} parent=1 // pred_check_branch
      %58 = sbr.rel (0) target = $region25
    $region24: #{tpu_custom_call.1} parent=1 // pred_region
      %s60 = ssub.s32 2048, 2048
      %61 = vsyncadd [#allocation10], %s60
      %s62 = sshll.u32 [#allocation9], 4
      %s63 = int_to_ptr.vmem [resolvable:$true] %s62
      %68 = dma.hbm_to_vmem [thread:$0]  %s5, 2048, %s63, [#allocation10], 128, 128, 8
    $region25: #{tpu_custom_call.1} parent=1 // pred_fallthru
      _
    // Predicated region
    $region26: #{tpu_custom_call.1} parent=1 // pred_check
      _
    $region27: #{tpu_custom_call.1} parent=1 // pred_check_branch
      %70 = sbr.rel (0) target = $region29
    $region28: #{tpu_custom_call.1} parent=1 // pred_region
      _
    $region29: #{tpu_custom_call.1} parent=1 // pred_fallthru
      _
    // Predicated region
    $region30: #{tpu_custom_call.1} parent=1 // pred_check
      _
    $region31: #{tpu_custom_call.1} parent=1 // pred_check_branch
      %72 = sbr.rel (0) target = $region33
    $region32: #{tpu_custom_call.1} parent=1 // pred_region
      %73 = dma.done [#allocation4], 32
    $region33: #{tpu_custom_call.1} parent=1 // pred_fallthru
      _
    // Predicated region
    $region34: #{tpu_custom_call.1} parent=1 // pred_check
      _
    $region35: #{tpu_custom_call.1} parent=1 // pred_check_branch
      %75 = sbr.rel (0) target = $region37
    $region36: #{tpu_custom_call.1} parent=1 // pred_region
      %76 = dma.done [#allocation7], 1024
    $region37: #{tpu_custom_call.1} parent=1 // pred_fallthru
      _
    // Predicated region
    $region38: #{tpu_custom_call.1} parent=1 // pred_check
      _
    $region39: #{tpu_custom_call.1} parent=1 // pred_check_branch
      %78 = sbr.rel (0) target = $region41
    $region40: #{tpu_custom_call.1} parent=1 // pred_region
      %79 = dma.done [#allocation7], 4096
    $region41: #{tpu_custom_call.1} parent=1 // pred_fallthru
      _
    // Predicated region
    $region42: #{tpu_custom_call.1} parent=1 // pred_check
      _
    $region43: #{tpu_custom_call.1} parent=1 // pred_check_branch
      %81 = sbr.rel (0) target = $region45
    $region44: #{tpu_custom_call.1} parent=1 // pred_region
      %82 = dma.done [#allocation10], 2048
    $region45: #{tpu_custom_call.1} parent=1 // pred_fallthru
      _
    %p83 = scmp.eq.s32.totalorder 0, 0
    // Predicated region
    $region46: #{tpu_custom_call.1} parent=1 // pred_check
      %p84 = pneg %p83
    $region47: #{tpu_custom_call.1} parent=1 // pred_check_branch
      %86 = sbr.rel (%p84) target = $region49
    $region48: #{tpu_custom_call.1} parent=1 // pred_region
      %v87 = vld [vmem:[#allocation3] sm:$0x3]
      %v88 = vld [vmem:[#allocation6] sm:$0xff]
      %v89 = vld [vmem:[#allocation6 + $0x8] sm:$0xff]
      %v90 = vld [vmem:[#allocation6 + $0x10] sm:$0xff]
      %v91 = vld [vmem:[#allocation6 + $0x18] sm:$0xff]
      %v92 = vld [vmem:[#allocation6 + $0x20] sm:$0xff]
      %v93 = vld [vmem:[#allocation6 + $0x28] sm:$0xff]
      %v94 = vld [vmem:[#allocation6 + $0x30] sm:$0xff]
      %v95 = vld [vmem:[#allocation6 + $0x38] sm:$0xff]
      %v96 = vld [vmem:[%s2] sm:$0x3]
      %v98 = vlaneseq
      %v99 = vshrl.u32 %v98, 7
      %v100 = vsub.s32 0, %v99
      %v101 = vrot.slane %v96, %v100
      %v102 = vlaneseq
      %v103 = vshrl.u32 %v102, 7
      %v104 = vsub.s32 1, %v103
      %v105 = vrot.slane %v96, %v104
      %vm108 = vcmask 261120
      %v110 = vsel %vm108, %v87, 0
      %112 = vmatprep.subr.mxu0 %v89
      %113 = vmatpush1.msra.mxu0 %v88
      %114 = vmatprep.subr.mxu0 %v91
      %115 = vmatpush1.msra.mxu0 %v90
      %116 = vmatprep.subr.mxu0 %v93
      %117 = vmatpush1.msra.mxu0 %v92
      %118 = vmatprep.subr.mxu0 %v95
      %119 = vmatpush1.msra.mxu0 %v94
      %120 = vmatprep.subr.mxu0 0.0
      %121 = vmatpush1.msra.mxu0 0.0
      %122 = vmatprep.subr.mxu0 0.0
      %123 = vmatpush1.msra.mxu0 0.0
      %124 = vmatprep.subr.mxu0 0.0
      %125 = vmatpush1.msra.mxu0 0.0
      %126 = vmatprep.subr.mxu0 0.0
      %127 = vmatpush1.msra.mxu0 0.0
      %128 = vmatprep.subr.mxu0 0.0
      %129 = vmatpush1.msra.mxu0 0.0
      %130 = vmatprep.subr.mxu0 0.0
      %131 = vmatpush1.msra.mxu0 0.0
      %132 = vmatprep.subr.mxu0 0.0
      %133 = vmatpush1.msra.mxu0 0.0
      %134 = vmatprep.subr.mxu0 0.0
      %135 = vmatpush1.msra.mxu0 0.0
      %136 = vmatprep.subr.mxu0 0.0
      %137 = vmatpush1.msra.mxu0 0.0
      %138 = vmatprep.subr.mxu0 0.0
      %139 = vmatpush1.msra.mxu0 0.0
      %140 = vmatprep.subr.mxu0 0.0
      %141 = vmatpush1.msra.mxu0 0.0
      %142 = vmatprep.subr.mxu0 0.0
      %143 = vmatpush1.msra.mxu0 0.0
      %144 = vmatprep.subr.mxu0 0.0
      %145 = vmatpush1.msra.mxu0 0.0
      %146 = vmatprep.subr.mxu0 0.0
      %147 = vmatpush1.msra.mxu0 0.0
      %148 = vmatprep.subr.mxu0 0.0
      %149 = vmatpush1.msra.mxu0 0.0
      %150 = vmatprep.subr.mxu0 0.0
      %151 = vmatpush1.msra.mxu0 0.0
      %152 = vmatprep.subr.mxu0 0.0
      %153 = vmatpush1.msra.mxu0 0.0
      %154 = vmatprep.subr.mxu0 0.0
      %155 = vmatpush1.msra.mxu0 0.0
      %156 = vmatprep.subr.mxu0 0.0
      %157 = vmatpush1.msra.mxu0 0.0
      %158 = vmatprep.subr.mxu0 0.0
      %159 = vmatpush1.msra.mxu0 0.0
      %160 = vmatprep.subr.mxu0 0.0
      %161 = vmatpush1.msra.mxu0 0.0
      %162 = vmatprep.subr.mxu0 0.0
      %163 = vmatpush1.msra.mxu0 0.0
      %164 = vmatprep.subr.mxu0 0.0
      %165 = vmatpush1.msra.mxu0 0.0
      %166 = vmatprep.subr.mxu0 0.0
      %167 = vmatpush1.msra.mxu0 0.0
      %168 = vmatprep.subr.mxu0 0.0
      %169 = vmatpush1.msra.mxu0 0.0
      %170 = vmatprep.subr.mxu0 0.0
      %171 = vmatpush1.msra.mxu0 0.0
      %172 = vmatprep.subr.mxu0 0.0
      %173 = vmatpush1.msra.mxu0 0.0
      %174 = vmatprep.subr.mxu0 0.0
      %175 = vmatpush1.msra.mxu0 0.0
      %176 = vmatprep.mubr.f32.mxu0 0.0
      %177 = vmatmul.mubr.f32.gmra.mrb[0].mxu0 %v110
      %v178 = vpop.f32.mrb[0].mxu0
      %v179 = vadd.f32 %v101, %v178
      %v180 = vpop.f32.mrb[0].mxu0
      %v181 = vadd.f32 %v105, %v180
      %182 = vdwg.mxu0
      %vm183 = vcmp.gt.f32.partialorder %v179, 0.0
      %vm184 = vcmp.gt.f32.partialorder %v181, 0.0
      %v185 = vmul.f32 %v179, 0.01
      %v186 = vmul.f32 %v181, 0.01
      %v187 = vsel %vm183, %v179, %v185
      %v188 = vsel %vm184, %v181, %v186
      %v189 = vld [vmem:[#allocation8] sm:$0xff]
      %v190 = vld [vmem:[#allocation8 + $0x8] sm:$0xff]
      %v191 = vld [vmem:[#allocation8 + $0x10] sm:$0xff]
      %v192 = vld [vmem:[#allocation8 + $0x18] sm:$0xff]
      %v193 = vld [vmem:[#allocation8 + $0x20] sm:$0xff]
      %v194 = vld [vmem:[#allocation8 + $0x28] sm:$0xff]
      %v195 = vld [vmem:[#allocation8 + $0x30] sm:$0xff]
      %v196 = vld [vmem:[#allocation8 + $0x38] sm:$0xff]
      %v197 = vld [vmem:[#allocation8 + $0x40] sm:$0xff]
      %v198 = vld [vmem:[#allocation8 + $0x48] sm:$0xff]
      %v199 = vld [vmem:[#allocation8 + $0x50] sm:$0xff]
      %v200 = vld [vmem:[#allocation8 + $0x58] sm:$0xff]
      %v201 = vld [vmem:[#allocation8 + $0x60] sm:$0xff]
      %v202 = vld [vmem:[#allocation8 + $0x68] sm:$0xff]
      %v203 = vld [vmem:[#allocation8 + $0x70] sm:$0xff]
      %v204 = vld [vmem:[#allocation8 + $0x78] sm:$0xff]
      %v205 = vld [vmem:[#allocation8 + $0x80] sm:$0xff]
      %v206 = vld [vmem:[#allocation8 + $0x88] sm:$0xff]
      %v207 = vld [vmem:[#allocation8 + $0x90] sm:$0xff]
      %v208 = vld [vmem:[#allocation8 + $0x98] sm:$0xff]
      %v209 = vld [vmem:[#allocation8 + $0xa0] sm:$0xff]
      %v210 = vld [vmem:[#allocation8 + $0xa8] sm:$0xff]
      %v211 = vld [vmem:[#allocation8 + $0xb0] sm:$0xff]
      %v212 = vld [vmem:[#allocation8 + $0xb8] sm:$0xff]
      %v213 = vld [vmem:[#allocation8 + $0xc0] sm:$0xff]
      %v214 = vld [vmem:[#allocation8 + $0xc8] sm:$0xff]
      %v215 = vld [vmem:[#allocation8 + $0xd0] sm:$0xff]
      %v216 = vld [vmem:[#allocation8 + $0xd8] sm:$0xff]
      %v217 = vld [vmem:[#allocation8 + $0xe0] sm:$0xff]
      %v218 = vld [vmem:[#allocation8 + $0xe8] sm:$0xff]
      %v219 = vld [vmem:[#allocation8 + $0xf0] sm:$0xff]
      %v220 = vld [vmem:[#allocation8 + $0xf8] sm:$0xff]
      %v221 = vld [vmem:[%s4] sm:$0x1]
      %v223 = vlaneseq
      %v224 = vshrl.u32 %v223, 7
      %v225 = vsub.s32 0, %v224
      %v226 = vrot.slane %v221, %v225
      %228 = vmatprep.subr.mxu0 0.0
      %229 = vmatpush1.msra.mxu0 %v189
      %230 = vmatprep.subr.mxu0 0.0
      %231 = vmatpush1.msra.mxu0 %v190
      %232 = vmatprep.subr.mxu0 0.0
      %233 = vmatpush1.msra.mxu0 %v191
      %234 = vmatprep.subr.mxu0 0.0
      %235 = vmatpush1.msra.mxu0 %v192
      %236 = vmatprep.subr.mxu0 0.0
      %237 = vmatpush1.msra.mxu0 %v193
      %238 = vmatprep.subr.mxu0 0.0
      %239 = vmatpush1.msra.mxu0 %v194
      %240 = vmatprep.subr.mxu0 0.0
      %241 = vmatpush1.msra.mxu0 %v195
      %242 = vmatprep.subr.mxu0 0.0
      %243 = vmatpush1.msra.mxu0 %v196
      %244 = vmatprep.subr.mxu0 0.0
      %245 = vmatpush1.msra.mxu0 %v197
      %246 = vmatprep.subr.mxu0 0.0
      %247 = vmatpush1.msra.mxu0 %v198
      %248 = vmatprep.subr.mxu0 0.0
      %249 = vmatpush1.msra.mxu0 %v199
      %250 = vmatprep.subr.mxu0 0.0
      %251 = vmatpush1.msra.mxu0 %v200
      %252 = vmatprep.subr.mxu0 0.0
      %253 = vmatpush1.msra.mxu0 %v201
      %254 = vmatprep.subr.mxu0 0.0
      %255 = vmatpush1.msra.mxu0 %v202
      %256 = vmatprep.subr.mxu0 0.0
      %257 = vmatpush1.msra.mxu0 %v203
      %258 = vmatprep.subr.mxu0 0.0
      %259 = vmatpush1.msra.mxu0 %v204
      %260 = vmatprep.subr.mxu0 0.0
      %261 = vmatpush1.msra.mxu0 %v205
      %262 = vmatprep.subr.mxu0 0.0
      %263 = vmatpush1.msra.mxu0 %v206
      %264 = vmatprep.subr.mxu0 0.0
      %265 = vmatpush1.msra.mxu0 %v207
      %266 = vmatprep.subr.mxu0 0.0
      %267 = vmatpush1.msra.mxu0 %v208
      %268 = vmatprep.subr.mxu0 0.0
      %269 = vmatpush1.msra.mxu0 %v209
      %270 = vmatprep.subr.mxu0 0.0
      %271 = vmatpush1.msra.mxu0 %v210
      %272 = vmatprep.subr.mxu0 0.0
      %273 = vmatpush1.msra.mxu0 %v211
      %274 = vmatprep.subr.mxu0 0.0
      %275 = vmatpush1.msra.mxu0 %v212
      %276 = vmatprep.subr.mxu0 0.0
      %277 = vmatpush1.msra.mxu0 %v213
      %278 = vmatprep.subr.mxu0 0.0
      %279 = vmatpush1.msra.mxu0 %v214
      %280 = vmatprep.subr.mxu0 0.0
      %281 = vmatpush1.msra.mxu0 %v215
      %282 = vmatprep.subr.mxu0 0.0
      %283 = vmatpush1.msra.mxu0 %v216
      %284 = vmatprep.subr.mxu0 0.0
      %285 = vmatpush1.msra.mxu0 %v217
      %286 = vmatprep.subr.mxu0 0.0
      %287 = vmatpush1.msra.mxu0 %v218
      %288 = vmatprep.subr.mxu0 0.0
      %289 = vmatpush1.msra.mxu0 %v219
      %290 = vmatprep.subr.mxu0 0.0
      %291 = vmatpush1.msra.mxu0 %v220
      %292 = vmatprep.mubr.f32.mxu0 %v188
      %293 = vmatmul.mubr.f32.gmra.mrb[0].mxu0 %v187
      %v294 = vpop.f32.mrb[0].mxu0
      %v295 = vadd.f32 %v226, %v294
      %v296 = vpop.f32.mrb[0].mxu0
      %297 = vdwg.mxu0
      %vm298 = vcmp.gt.f32.partialorder %v295, 0.0
      %v299 = vmul.f32 %v295, 0.01
      %v300 = vsel %vm298, %v295, %v299
      %301 = vst [vmem:[#allocation2] sm:$0x3] %v300
      %302 = vst [vmem:[#allocation11] sm:$0x3] %v300
    $region49: #{tpu_custom_call.1} parent=1 // pred_fallthru
      _
    %v303 = vld [vmem:[#allocation2] sm:$0x3]
    %v304 = vld [vmem:[#allocation9] sm:$0xff]
    %v305 = vld [vmem:[#allocation9 + $0x8] sm:$0xff]
    %v306 = vld [vmem:[#allocation9 + $0x10] sm:$0xff]
    %v307 = vld [vmem:[#allocation9 + $0x18] sm:$0xff]
    %v308 = vld [vmem:[#allocation9 + $0x20] sm:$0xff]
    %v309 = vld [vmem:[#allocation9 + $0x28] sm:$0xff]
    %v310 = vld [vmem:[#allocation9 + $0x30] sm:$0xff]
    %v311 = vld [vmem:[#allocation9 + $0x38] sm:$0xff]
    %v312 = vld [vmem:[#allocation9 + $0x40] sm:$0xff]
    %v313 = vld [vmem:[#allocation9 + $0x48] sm:$0xff]
    %v314 = vld [vmem:[#allocation9 + $0x50] sm:$0xff]
    %v315 = vld [vmem:[#allocation9 + $0x58] sm:$0xff]
    %v316 = vld [vmem:[#allocation9 + $0x60] sm:$0xff]
    %v317 = vld [vmem:[#allocation9 + $0x68] sm:$0xff]
    %v318 = vld [vmem:[#allocation9 + $0x70] sm:$0xff]
    %v319 = vld [vmem:[#allocation9 + $0x78] sm:$0xff]
    %v320 = vld [vmem:[%s6] sm:$0x1]
    %v322 = vlaneseq
    %v323 = vshrl.u32 %v322, 7
    %v324 = vsub.s32 0, %v323
    %v325 = vrot.slane %v320, %v324
    %327 = vmatprep.subr.mxu0 0.0
    %328 = vmatpush1.msra.mxu0 %v304
    %329 = vmatprep.subr.mxu0 0.0
    %330 = vmatpush1.msra.mxu0 %v305
    %331 = vmatprep.subr.mxu0 0.0
    %332 = vmatpush1.msra.mxu0 %v306
    %333 = vmatprep.subr.mxu0 0.0
    %334 = vmatpush1.msra.mxu0 %v307
    %335 = vmatprep.subr.mxu0 0.0
    %336 = vmatpush1.msra.mxu0 %v308
    %337 = vmatprep.subr.mxu0 0.0
    %338 = vmatpush1.msra.mxu0 %v309
    %339 = vmatprep.subr.mxu0 0.0
    %340 = vmatpush1.msra.mxu0 %v310
    %341 = vmatprep.subr.mxu0 0.0
    %342 = vmatpush1.msra.mxu0 %v311
    %343 = vmatprep.subr.mxu0 0.0
    %344 = vmatpush1.msra.mxu0 %v312
    %345 = vmatprep.subr.mxu0 0.0
    %346 = vmatpush1.msra.mxu0 %v313
    %347 = vmatprep.subr.mxu0 0.0
    %348 = vmatpush1.msra.mxu0 %v314
    %349 = vmatprep.subr.mxu0 0.0
    %350 = vmatpush1.msra.mxu0 %v315
    %351 = vmatprep.subr.mxu0 0.0
    %352 = vmatpush1.msra.mxu0 %v316
    %353 = vmatprep.subr.mxu0 0.0
    %354 = vmatpush1.msra.mxu0 %v317
    %355 = vmatprep.subr.mxu0 0.0
    %356 = vmatpush1.msra.mxu0 %v318
    %357 = vmatprep.subr.mxu0 0.0
    %358 = vmatpush1.msra.mxu0 %v319
    %359 = vmatprep.subr.mxu0 0.0
    %360 = vmatpush1.msra.mxu0 0.0
    %361 = vmatprep.subr.mxu0 0.0
    %362 = vmatpush1.msra.mxu0 0.0
    %363 = vmatprep.subr.mxu0 0.0
    %364 = vmatpush1.msra.mxu0 0.0
    %365 = vmatprep.subr.mxu0 0.0
    %366 = vmatpush1.msra.mxu0 0.0
    %367 = vmatprep.subr.mxu0 0.0
    %368 = vmatpush1.msra.mxu0 0.0
    %369 = vmatprep.subr.mxu0 0.0
    %370 = vmatpush1.msra.mxu0 0.0
    %371 = vmatprep.subr.mxu0 0.0
    %372 = vmatpush1.msra.mxu0 0.0
    %373 = vmatprep.subr.mxu0 0.0
    %374 = vmatpush1.msra.mxu0 0.0
    %375 = vmatprep.subr.mxu0 0.0
    %376 = vmatpush1.msra.mxu0 0.0
    %377 = vmatprep.subr.mxu0 0.0
    %378 = vmatpush1.msra.mxu0 0.0
    %379 = vmatprep.subr.mxu0 0.0
    %380 = vmatpush1.msra.mxu0 0.0
    %381 = vmatprep.subr.mxu0 0.0
    %382 = vmatpush1.msra.mxu0 0.0
    %383 = vmatprep.subr.mxu0 0.0
    %384 = vmatpush1.msra.mxu0 0.0
    %385 = vmatprep.subr.mxu0 0.0
    %386 = vmatpush1.msra.mxu0 0.0
    %387 = vmatprep.subr.mxu0 0.0
    %388 = vmatpush1.msra.mxu0 0.0
    %389 = vmatprep.subr.mxu0 0.0
    %390 = vmatpush1.msra.mxu0 0.0
    %391 = vmatprep.mubr.f32.mxu0 0.0
    %392 = vmatmul.mubr.f32.gmra.mrb[0].mxu0 %v303
    %v393 = vpop.f32.mrb[0].mxu0
    %v394 = vadd.f32 %v325, %v393
    %v395 = vpop.f32.mrb[0].mxu0
    %396 = vdwg.mxu0
    %397 = vst [vmem:[#allocation12] sm:$0x3] %v394
    // Predicated region
    $region50: #{tpu_custom_call.1} parent=1 // pred_check
      _
    $region51: #{tpu_custom_call.1} parent=1 // pred_check_branch
      %399 = sbr.rel (0) target = $region53
    $region52: #{tpu_custom_call.1} parent=1 // pred_region
      %s401 = ssub.s32 32, 32
      %402 = vsyncadd [#allocation5], %s401
      %s404 = sshll.u32 [#allocation11], 4
      %s405 = int_to_ptr.vmem [resolvable:$true] %s404
      %407 = dma.vmem_to_hbm [thread:$0]  %s405, 32, %s7, [#allocation5]
    $region53: #{tpu_custom_call.1} parent=1 // pred_fallthru
      _
    // Predicated region
    $region54: #{tpu_custom_call.1} parent=1 // pred_check
      _
    $region55: #{tpu_custom_call.1} parent=1 // pred_check_branch
      %409 = sbr.rel (0) target = $region57
    $region56: #{tpu_custom_call.1} parent=1 // pred_region
      %s411 = ssub.s32 32, 32
      %412 = vsyncadd [#allocation13], %s411
      %s414 = sshll.u32 [#allocation12], 4
      %s415 = int_to_ptr.vmem [resolvable:$true] %s414
      %417 = dma.vmem_to_hbm [thread:$0]  %s415, 32, %s8, [#allocation13]
    $region57: #{tpu_custom_call.1} parent=1 // pred_fallthru
      _
    // Predicated region
    $region58: #{tpu_custom_call.1} parent=1 // pred_check
      _
    $region59: #{tpu_custom_call.1} parent=1 // pred_check_branch
      %419 = sbr.rel (0) target = $region61
    $region60: #{tpu_custom_call.1} parent=1 // pred_region
      %420 = dma.done [#allocation5], 32
    $region61: #{tpu_custom_call.1} parent=1 // pred_fallthru
      _
    // Predicated region
    $region62: #{tpu_custom_call.1} parent=1 // pred_check
      _
    $region63: #{tpu_custom_call.1} parent=1 // pred_check_branch
      %422 = sbr.rel (0) target = $region65
    $region64: #{tpu_custom_call.1} parent=1 // pred_region
      %423 = dma.done [#allocation13], 32
    $region65: #{tpu_custom_call.1} parent=1 // pred_fallthru
      _
    %424 = vsyncpa [#allocation4], 1
    %425 = vsyncpa [#allocation7], 1
    %426 = vsyncpa [#allocation10], 1
    %427 = vsyncpa [#allocation5], 1
    %428 = vsyncpa [#allocation13], 1

// kernel: tpu_custom_call.1
$region0: #{tpu_custom_call.1}
  #allocation0 [shape = 'u32[]', space=smem, size = 0x4, offset = 0x4, fixed_abs, tag = 'smem constant byte address 0x4 - core index']
  #allocation1 [shape = 'u32[144,128]{1,0:T(1,128)}', space=vmem, size = 0x12000, scoped, tag = 'internal scratch']
  #allocation2 [shape = 'f32[2,128]{1,0:T(2,128)}', space=vmem, size = 0x400, scoped, tag = 'scratch operand']
  %s0 = inlined_call_operand.hbm [shape: f32[2,32], index: 0, kind: input, shape index: {}]
  %s1 = inlined_call_operand.hbm [shape: f32[32,256], index: 1, kind: input, shape index: {}]
  %s2 = inlined_call_operand.vmem [shape: f32[1,256], index: 2, kind: input, shape index: {}]
  %s3 = inlined_call_operand.hbm [shape: f32[256,128], index: 3, kind: input, shape index: {}]
  %s4 = inlined_call_operand.vmem [shape: f32[1,128], index: 4, kind: input, shape index: {}]
  %s5 = inlined_call_operand.hbm [shape: f32[128,128], index: 5, kind: input, shape index: {}]
  %s6 = inlined_call_operand.vmem [shape: f32[1,128], index: 6, kind: input, shape index: {}]
  %s7 = inlined_call_operand.hbm [shape: f32[2,128], index: 7, kind: output, shape index: {0}]
  %s8 = inlined_call_operand.hbm [shape: f32[2,128], index: 8, kind: output, shape index: {1}]
  %9 = xla_tuple %s7, %s8
  %s10 = sld [smem:[#allocation0]]
  $region66: #{tpu_custom_call.1} parent=0
    _
  %s12 = ssub.s32 1, %s10
  %s13 = scalar_select 0, %s12, %s10
  $region1: #{tpu_custom_call.1} parent=0
    #allocation3 [shape = 'u8[1024]{0}', space=vmem, size = 0x400, scoped, tag = 'input window, operand 0, single buffered']
    #allocation4 [shape = 's32[1]{0}', space=sflag, size = 0x4, scoped, tag = 'scoped memory for tpu_custom_call.1']
    #allocation5 [shape = 's32[1]{0}', space=sflag, size = 0x4, scoped, tag = 'scoped memory for tpu_custom_call.1']
    #allocation6 [shape = 'u8[32768]{0}', space=vmem, size = 0x8000, scoped, tag = 'input window, operand 1, single buffered']
    #allocation7 [shape = 's32[1]{0}', space=sflag, size = 0x4, scoped, tag = 'scoped memory for tpu_custom_call.1']
    #allocation8 [shape = 'u8[131072]{0}', space=vmem, size = 0x20000, scoped, tag = 'input window, operand 3, single buffered']
    #allocation9 [shape = 'u8[65536]{0}', space=vmem, size = 0x10000, scoped, tag = 'input window, operand 5, single buffered']
    #allocation10 [shape = 's32[1]{0}', space=sflag, size = 0x4, scoped, tag = 'scoped memory for tpu_custom_call.1']
    #allocation11 [shape = 'u8[1024]{0}', space=vmem, size = 0x400, scoped, tag = 'output window, operand 0, single buffered']
    #allocation12 [shape = 'u8[1024]{0}', space=vmem, size = 0x400, scoped, tag = 'output window, operand 1, single buffered']
    #allocation13 [shape = 's32[1]{0}', space=sflag, size = 0x4, scoped, tag = 'scoped memory for tpu_custom_call.1']
    %14 = vsyncpa [#allocation4], 0
    %15 = vsyncpa [#allocation7], 0
    %16 = vsyncpa [#allocation10], 0
    %17 = vsyncpa [#allocation5], 0
    %18 = vsyncpa [#allocation13], 0
    // Predicated region
    $region2: #{tpu_custom_call.1} parent=1 // pred_check
      _
    $region3: #{tpu_custom_call.1} parent=1 // pred_check_branch
      %20 = sbr.rel (0) target = $region5
    $region4: #{tpu_custom_call.1} parent=1 // pred_region
      %s22 = ssub.s32 32, 32
      %23 = vsyncadd [#allocation4], %s22
      %s25 = sshll.u32 [#allocation3], 4
      %s26 = int_to_ptr.vmem [resolvable:$true] %s25
      %28 = dma.hbm_to_vmem [thread:$0]  %s0, 32, %s26, [#allocation4]
    $region5: #{tpu_custom_call.1} parent=1 // pred_fallthru
      _
    // Predicated region
    $region6: #{tpu_custom_call.1} parent=1 // pred_check
      _
    $region7: #{tpu_custom_call.1} parent=1 // pred_check_branch
      %30 = sbr.rel (0) target = $region9
    $region8: #{tpu_custom_call.1} parent=1 // pred_region
      %s32 = ssub.s32 1024, 1024
      %33 = vsyncadd [#allocation7], %s32
      %s34 = sshll.u32 [#allocation6], 4
      %s35 = int_to_ptr.vmem [resolvable:$true] %s34
      %40 = dma.hbm_to_vmem [thread:$0]  %s1, 1024, %s35, [#allocation7], 256, 256, 16
    $region9: #{tpu_custom_call.1} parent=1 // pred_fallthru
      _
    // Predicated region
    $region10: #{tpu_custom_call.1} parent=1 // pred_check
      _
    $region11: #{tpu_custom_call.1} parent=1 // pred_check_branch
      %42 = sbr.rel (0) target = $region13
    $region12: #{tpu_custom_call.1} parent=1 // pred_region
      _
    $region13: #{tpu_custom_call.1} parent=1 // pred_fallthru
      _
    // Predicated region
    $region14: #{tpu_custom_call.1} parent=1 // pred_check
      _
    $region15: #{tpu_custom_call.1} parent=1 // pred_check_branch
      %44 = sbr.rel (0) target = $region17
    $region16: #{tpu_custom_call.1} parent=1 // pred_region
      %s46 = ssub.s32 4096, 4096
      %47 = vsyncadd [#allocation7], %s46
      %s48 = sshll.u32 [#allocation8], 4
      %s49 = int_to_ptr.vmem [resolvable:$true] %s48
      %54 = dma.hbm_to_vmem [thread:$0]  %s3, 4096, %s49, [#allocation7], 128, 128, 8
    $region17: #{tpu_custom_call.1} parent=1 // pred_fallthru
      _
    // Predicated region
    $region18: #{tpu_custom_call.1} parent=1 // pred_check
      _
    $region19: #{tpu_custom_call.1} parent=1 // pred_check_branch
      %56 = sbr.rel (0) target = $region21
    $region20: #{tpu_custom_call.1} parent=1 // pred_region
      _
    $region21: #{tpu_custom_call.1} parent=1 // pred_fallthru
      _
    // Predicated region
    $region22: #{tpu_custom_call.1} parent=1 // pred_check
      _
    $region23: #{tpu_custom_call.1} parent=1 // pred_check_branch
      %58 = sbr.rel (0) target = $region25
    $region24: #{tpu_custom_call.1} parent=1 // pred_region
      %s60 = ssub.s32 2048, 2048
      %61 = vsyncadd [#allocation10], %s60
      %s62 = sshll.u32 [#allocation9], 4
      %s63 = int_to_ptr.vmem [resolvable:$true] %s62
      %68 = dma.hbm_to_vmem [thread:$0]  %s5, 2048, %s63, [#allocation10], 128, 128, 8
    $region25: #{tpu_custom_call.1} parent=1 // pred_fallthru
      _
    // Predicated region
    $region26: #{tpu_custom_call.1} parent=1 // pred_check
      _
    $region27: #{tpu_custom_call.1} parent=1 // pred_check_branch
      %70 = sbr.rel (0) target = $region29
    $region28: #{tpu_custom_call.1} parent=1 // pred_region
      _
    $region29: #{tpu_custom_call.1} parent=1 // pred_fallthru
      _
    // Predicated region
    $region30: #{tpu_custom_call.1} parent=1 // pred_check
      _
    $region31: #{tpu_custom_call.1} parent=1 // pred_check_branch
      %72 = sbr.rel (0) target = $region33
    $region32: #{tpu_custom_call.1} parent=1 // pred_region
      %73 = dma.done [#allocation4], 32
    $region33: #{tpu_custom_call.1} parent=1 // pred_fallthru
      _
    // Predicated region
    $region34: #{tpu_custom_call.1} parent=1 // pred_check
      _
    $region35: #{tpu_custom_call.1} parent=1 // pred_check_branch
      %75 = sbr.rel (0) target = $region37
    $region36: #{tpu_custom_call.1} parent=1 // pred_region
      %76 = dma.done [#allocation7], 1024
    $region37: #{tpu_custom_call.1} parent=1 // pred_fallthru
      _
    // Predicated region
    $region38: #{tpu_custom_call.1} parent=1 // pred_check
      _
    $region39: #{tpu_custom_call.1} parent=1 // pred_check_branch
      %78 = sbr.rel (0) target = $region41
    $region40: #{tpu_custom_call.1} parent=1 // pred_region
      %79 = dma.done [#allocation7], 4096
    $region41: #{tpu_custom_call.1} parent=1 // pred_fallthru
      _
    // Predicated region
    $region42: #{tpu_custom_call.1} parent=1 // pred_check
      _
    $region43: #{tpu_custom_call.1} parent=1 // pred_check_branch
      %81 = sbr.rel (0) target = $region45
    $region44: #{tpu_custom_call.1} parent=1 // pred_region
      %82 = dma.done [#allocation10], 2048
    $region45: #{tpu_custom_call.1} parent=1 // pred_fallthru
      _
    %p83 = scmp.eq.s32.totalorder 0, 0
    // Predicated region
    $region46: #{tpu_custom_call.1} parent=1 // pred_check
      %p84 = pneg %p83
    $region47: #{tpu_custom_call.1} parent=1 // pred_check_branch
      %86 = sbr.rel (%p84) target = $region49
    $region48: #{tpu_custom_call.1} parent=1 // pred_region
      %v87 = vld [vmem:[#allocation3] sm:$0x3]
      %v88 = vld [vmem:[#allocation6] sm:$0xff]
      %v89 = vld [vmem:[#allocation6 + $0x8] sm:$0xff]
      %v90 = vld [vmem:[#allocation6 + $0x10] sm:$0xff]
      %v91 = vld [vmem:[#allocation6 + $0x18] sm:$0xff]
      %v92 = vld [vmem:[#allocation6 + $0x20] sm:$0xff]
      %v93 = vld [vmem:[#allocation6 + $0x28] sm:$0xff]
      %v94 = vld [vmem:[#allocation6 + $0x30] sm:$0xff]
      %v95 = vld [vmem:[#allocation6 + $0x38] sm:$0xff]
      %v96 = vld [vmem:[%s2] sm:$0x3]
      %v98 = vlaneseq
      %v99 = vshrl.u32 %v98, 7
      %v100 = vsub.s32 0, %v99
      %v101 = vrot.slane %v96, %v100
      %v102 = vlaneseq
      %v103 = vshrl.u32 %v102, 7
      %v104 = vsub.s32 1, %v103
      %v105 = vrot.slane %v96, %v104
      %vm108 = vcmask 261120
      %v110 = vsel %vm108, %v87, 0
      %112 = vmatprep.subr.mxu0 %v89
      %113 = vmatpush1.msra.mxu0 %v88
      %114 = vmatprep.subr.mxu0 %v91
      %115 = vmatpush1.msra.mxu0 %v90
      %116 = vmatprep.subr.mxu0 %v93
      %117 = vmatpush1.msra.mxu0 %v92
      %118 = vmatprep.subr.mxu0 %v95
      %119 = vmatpush1.msra.mxu0 %v94
      %120 = vmatprep.subr.mxu0 0.0
      %121 = vmatpush1.msra.mxu0 0.0
      %122 = vmatprep.subr.mxu0 0.0
      %123 = vmatpush1.msra.mxu0 0.0
      %124 = vmatprep.subr.mxu0 0.0
      %125 = vmatpush1.msra.mxu0 0.0
      %126 = vmatprep.subr.mxu0 0.0
      %127 = vmatpush1.msra.mxu0 0.0
      %128 = vmatprep.subr.mxu0 0.0
      %129 = vmatpush1.msra.mxu0 0.0
      %130 = vmatprep.subr.mxu0 0.0
      %131 = vmatpush1.msra.mxu0 0.0
      %132 = vmatprep.subr.mxu0 0.0
      %133 = vmatpush1.msra.mxu0 0.0
      %134 = vmatprep.subr.mxu0 0.0
      %135 = vmatpush1.msra.mxu0 0.0
      %136 = vmatprep.subr.mxu0 0.0
      %137 = vmatpush1.msra.mxu0 0.0
      %138 = vmatprep.subr.mxu0 0.0
      %139 = vmatpush1.msra.mxu0 0.0
      %140 = vmatprep.subr.mxu0 0.0
      %141 = vmatpush1.msra.mxu0 0.0
      %142 = vmatprep.subr.mxu0 0.0
      %143 = vmatpush1.msra.mxu0 0.0
      %144 = vmatprep.subr.mxu0 0.0
      %145 = vmatpush1.msra.mxu0 0.0
      %146 = vmatprep.subr.mxu0 0.0
      %147 = vmatpush1.msra.mxu0 0.0
      %148 = vmatprep.subr.mxu0 0.0
      %149 = vmatpush1.msra.mxu0 0.0
      %150 = vmatprep.subr.mxu0 0.0
      %151 = vmatpush1.msra.mxu0 0.0
      %152 = vmatprep.subr.mxu0 0.0
      %153 = vmatpush1.msra.mxu0 0.0
      %154 = vmatprep.subr.mxu0 0.0
      %155 = vmatpush1.msra.mxu0 0.0
      %156 = vmatprep.subr.mxu0 0.0
      %157 = vmatpush1.msra.mxu0 0.0
      %158 = vmatprep.subr.mxu0 0.0
      %159 = vmatpush1.msra.mxu0 0.0
      %160 = vmatprep.subr.mxu0 0.0
      %161 = vmatpush1.msra.mxu0 0.0
      %162 = vmatprep.subr.mxu0 0.0
      %163 = vmatpush1.msra.mxu0 0.0
      %164 = vmatprep.subr.mxu0 0.0
      %165 = vmatpush1.msra.mxu0 0.0
      %166 = vmatprep.subr.mxu0 0.0
      %167 = vmatpush1.msra.mxu0 0.0
      %168 = vmatprep.subr.mxu0 0.0
      %169 = vmatpush1.msra.mxu0 0.0
      %170 = vmatprep.subr.mxu0 0.0
      %171 = vmatpush1.msra.mxu0 0.0
      %172 = vmatprep.subr.mxu0 0.0
      %173 = vmatpush1.msra.mxu0 0.0
      %174 = vmatprep.subr.mxu0 0.0
      %175 = vmatpush1.msra.mxu0 0.0
      %176 = vmatprep.mubr.f32.mxu0 0.0
      %177 = vmatmul.mubr.f32.gmra.mrb[0].mxu0 %v110
      %v178 = vpop.f32.mrb[0].mxu0
      %v179 = vadd.f32 %v101, %v178
      %v180 = vpop.f32.mrb[0].mxu0
      %v181 = vadd.f32 %v105, %v180
      %182 = vdwg.mxu0
      %vm183 = vcmp.gt.f32.partialorder %v179, 0.0
      %vm184 = vcmp.gt.f32.partialorder %v181, 0.0
      %v185 = vmul.f32 %v179, 0.01
      %v186 = vmul.f32 %v181, 0.01
      %v187 = vsel %vm183, %v179, %v185
      %v188 = vsel %vm184, %v181, %v186
      %v189 = vld [vmem:[#allocation8] sm:$0xff]
      %v190 = vld [vmem:[#allocation8 + $0x8] sm:$0xff]
      %v191 = vld [vmem:[#allocation8 + $0x10] sm:$0xff]
      %v192 = vld [vmem:[#allocation8 + $0x18] sm:$0xff]
      %v193 = vld [vmem:[#allocation8 + $0x20] sm:$0xff]
      %v194 = vld [vmem:[#allocation8 + $0x28] sm:$0xff]
      %v195 = vld [vmem:[#allocation8 + $0x30] sm:$0xff]
      %v196 = vld [vmem:[#allocation8 + $0x38] sm:$0xff]
      %v197 = vld [vmem:[#allocation8 + $0x40] sm:$0xff]
      %v198 = vld [vmem:[#allocation8 + $0x48] sm:$0xff]
      %v199 = vld [vmem:[#allocation8 + $0x50] sm:$0xff]
      %v200 = vld [vmem:[#allocation8 + $0x58] sm:$0xff]
      %v201 = vld [vmem:[#allocation8 + $0x60] sm:$0xff]
      %v202 = vld [vmem:[#allocation8 + $0x68] sm:$0xff]
      %v203 = vld [vmem:[#allocation8 + $0x70] sm:$0xff]
      %v204 = vld [vmem:[#allocation8 + $0x78] sm:$0xff]
      %v205 = vld [vmem:[#allocation8 + $0x80] sm:$0xff]
      %v206 = vld [vmem:[#allocation8 + $0x88] sm:$0xff]
      %v207 = vld [vmem:[#allocation8 + $0x90] sm:$0xff]
      %v208 = vld [vmem:[#allocation8 + $0x98] sm:$0xff]
      %v209 = vld [vmem:[#allocation8 + $0xa0] sm:$0xff]
      %v210 = vld [vmem:[#allocation8 + $0xa8] sm:$0xff]
      %v211 = vld [vmem:[#allocation8 + $0xb0] sm:$0xff]
      %v212 = vld [vmem:[#allocation8 + $0xb8] sm:$0xff]
      %v213 = vld [vmem:[#allocation8 + $0xc0] sm:$0xff]
      %v214 = vld [vmem:[#allocation8 + $0xc8] sm:$0xff]
      %v215 = vld [vmem:[#allocation8 + $0xd0] sm:$0xff]
      %v216 = vld [vmem:[#allocation8 + $0xd8] sm:$0xff]
      %v217 = vld [vmem:[#allocation8 + $0xe0] sm:$0xff]
      %v218 = vld [vmem:[#allocation8 + $0xe8] sm:$0xff]
      %v219 = vld [vmem:[#allocation8 + $0xf0] sm:$0xff]
      %v220 = vld [vmem:[#allocation8 + $0xf8] sm:$0xff]
      %v221 = vld [vmem:[%s4] sm:$0x1]
      %v223 = vlaneseq
      %v224 = vshrl.u32 %v223, 7
      %v225 = vsub.s32 0, %v224
      %v226 = vrot.slane %v221, %v225
      %228 = vmatprep.subr.mxu0 0.0
      %229 = vmatpush1.msra.mxu0 %v189
      %230 = vmatprep.subr.mxu0 0.0
      %231 = vmatpush1.msra.mxu0 %v190
      %232 = vmatprep.subr.mxu0 0.0
      %233 = vmatpush1.msra.mxu0 %v191
      %234 = vmatprep.subr.mxu0 0.0
      %235 = vmatpush1.msra.mxu0 %v192
      %236 = vmatprep.subr.mxu0 0.0
      %237 = vmatpush1.msra.mxu0 %v193
      %238 = vmatprep.subr.mxu0 0.0
      %239 = vmatpush1.msra.mxu0 %v194
      %240 = vmatprep.subr.mxu0 0.0
      %241 = vmatpush1.msra.mxu0 %v195
      %242 = vmatprep.subr.mxu0 0.0
      %243 = vmatpush1.msra.mxu0 %v196
      %244 = vmatprep.subr.mxu0 0.0
      %245 = vmatpush1.msra.mxu0 %v197
      %246 = vmatprep.subr.mxu0 0.0
      %247 = vmatpush1.msra.mxu0 %v198
      %248 = vmatprep.subr.mxu0 0.0
      %249 = vmatpush1.msra.mxu0 %v199
      %250 = vmatprep.subr.mxu0 0.0
      %251 = vmatpush1.msra.mxu0 %v200
      %252 = vmatprep.subr.mxu0 0.0
      %253 = vmatpush1.msra.mxu0 %v201
      %254 = vmatprep.subr.mxu0 0.0
      %255 = vmatpush1.msra.mxu0 %v202
      %256 = vmatprep.subr.mxu0 0.0
      %257 = vmatpush1.msra.mxu0 %v203
      %258 = vmatprep.subr.mxu0 0.0
      %259 = vmatpush1.msra.mxu0 %v204
      %260 = vmatprep.subr.mxu0 0.0
      %261 = vmatpush1.msra.mxu0 %v205
      %262 = vmatprep.subr.mxu0 0.0
      %263 = vmatpush1.msra.mxu0 %v206
      %264 = vmatprep.subr.mxu0 0.0
      %265 = vmatpush1.msra.mxu0 %v207
      %266 = vmatprep.subr.mxu0 0.0
      %267 = vmatpush1.msra.mxu0 %v208
      %268 = vmatprep.subr.mxu0 0.0
      %269 = vmatpush1.msra.mxu0 %v209
      %270 = vmatprep.subr.mxu0 0.0
      %271 = vmatpush1.msra.mxu0 %v210
      %272 = vmatprep.subr.mxu0 0.0
      %273 = vmatpush1.msra.mxu0 %v211
      %274 = vmatprep.subr.mxu0 0.0
      %275 = vmatpush1.msra.mxu0 %v212
      %276 = vmatprep.subr.mxu0 0.0
      %277 = vmatpush1.msra.mxu0 %v213
      %278 = vmatprep.subr.mxu0 0.0
      %279 = vmatpush1.msra.mxu0 %v214
      %280 = vmatprep.subr.mxu0 0.0
      %281 = vmatpush1.msra.mxu0 %v215
      %282 = vmatprep.subr.mxu0 0.0
      %283 = vmatpush1.msra.mxu0 %v216
      %284 = vmatprep.subr.mxu0 0.0
      %285 = vmatpush1.msra.mxu0 %v217
      %286 = vmatprep.subr.mxu0 0.0
      %287 = vmatpush1.msra.mxu0 %v218
      %288 = vmatprep.subr.mxu0 0.0
      %289 = vmatpush1.msra.mxu0 %v219
      %290 = vmatprep.subr.mxu0 0.0
      %291 = vmatpush1.msra.mxu0 %v220
      %292 = vmatprep.mubr.f32.mxu0 %v188
      %293 = vmatmul.mubr.f32.gmra.mrb[0].mxu0 %v187
      %v294 = vpop.f32.mrb[0].mxu0
      %v295 = vadd.f32 %v226, %v294
      %v296 = vpop.f32.mrb[0].mxu0
      %297 = vdwg.mxu0
      %vm298 = vcmp.gt.f32.partialorder %v295, 0.0
      %v299 = vmul.f32 %v295, 0.01
      %v300 = vsel %vm298, %v295, %v299
      %301 = vst [vmem:[#allocation2] sm:$0x3] %v300
      %302 = vst [vmem:[#allocation11] sm:$0x3] %v300
    $region49: #{tpu_custom_call.1} parent=1 // pred_fallthru
      _
    %v303 = vld [vmem:[#allocation2] sm:$0x3]
    %v304 = vld [vmem:[#allocation9] sm:$0xff]
    %v305 = vld [vmem:[#allocation9 + $0x8] sm:$0xff]
    %v306 = vld [vmem:[#allocation9 + $0x10] sm:$0xff]
    %v307 = vld [vmem:[#allocation9 + $0x18] sm:$0xff]
    %v308 = vld [vmem:[#allocation9 + $0x20] sm:$0xff]
    %v309 = vld [vmem:[#allocation9 + $0x28] sm:$0xff]
    %v310 = vld [vmem:[#allocation9 + $0x30] sm:$0xff]
    %v311 = vld [vmem:[#allocation9 + $0x38] sm:$0xff]
    %v312 = vld [vmem:[#allocation9 + $0x40] sm:$0xff]
    %v313 = vld [vmem:[#allocation9 + $0x48] sm:$0xff]
    %v314 = vld [vmem:[#allocation9 + $0x50] sm:$0xff]
    %v315 = vld [vmem:[#allocation9 + $0x58] sm:$0xff]
    %v316 = vld [vmem:[#allocation9 + $0x60] sm:$0xff]
    %v317 = vld [vmem:[#allocation9 + $0x68] sm:$0xff]
    %v318 = vld [vmem:[#allocation9 + $0x70] sm:$0xff]
    %v319 = vld [vmem:[#allocation9 + $0x78] sm:$0xff]
    %v320 = vld [vmem:[%s6] sm:$0x1]
    %v322 = vlaneseq
    %v323 = vshrl.u32 %v322, 7
    %v324 = vsub.s32 0, %v323
    %v325 = vrot.slane %v320, %v324
    %327 = vmatprep.subr.mxu0 0.0
    %328 = vmatpush1.msra.mxu0 %v304
    %329 = vmatprep.subr.mxu0 0.0
    %330 = vmatpush1.msra.mxu0 %v305
    %331 = vmatprep.subr.mxu0 0.0
    %332 = vmatpush1.msra.mxu0 %v306
    %333 = vmatprep.subr.mxu0 0.0
    %334 = vmatpush1.msra.mxu0 %v307
    %335 = vmatprep.subr.mxu0 0.0
    %336 = vmatpush1.msra.mxu0 %v308
    %337 = vmatprep.subr.mxu0 0.0
    %338 = vmatpush1.msra.mxu0 %v309
    %339 = vmatprep.subr.mxu0 0.0
    %340 = vmatpush1.msra.mxu0 %v310
    %341 = vmatprep.subr.mxu0 0.0
    %342 = vmatpush1.msra.mxu0 %v311
    %343 = vmatprep.subr.mxu0 0.0
    %344 = vmatpush1.msra.mxu0 %v312
    %345 = vmatprep.subr.mxu0 0.0
    %346 = vmatpush1.msra.mxu0 %v313
    %347 = vmatprep.subr.mxu0 0.0
    %348 = vmatpush1.msra.mxu0 %v314
    %349 = vmatprep.subr.mxu0 0.0
    %350 = vmatpush1.msra.mxu0 %v315
    %351 = vmatprep.subr.mxu0 0.0
    %352 = vmatpush1.msra.mxu0 %v316
    %353 = vmatprep.subr.mxu0 0.0
    %354 = vmatpush1.msra.mxu0 %v317
    %355 = vmatprep.subr.mxu0 0.0
    %356 = vmatpush1.msra.mxu0 %v318
    %357 = vmatprep.subr.mxu0 0.0
    %358 = vmatpush1.msra.mxu0 %v319
    %359 = vmatprep.subr.mxu0 0.0
    %360 = vmatpush1.msra.mxu0 0.0
    %361 = vmatprep.subr.mxu0 0.0
    %362 = vmatpush1.msra.mxu0 0.0
    %363 = vmatprep.subr.mxu0 0.0
    %364 = vmatpush1.msra.mxu0 0.0
    %365 = vmatprep.subr.mxu0 0.0
    %366 = vmatpush1.msra.mxu0 0.0
    %367 = vmatprep.subr.mxu0 0.0
    %368 = vmatpush1.msra.mxu0 0.0
    %369 = vmatprep.subr.mxu0 0.0
    %370 = vmatpush1.msra.mxu0 0.0
    %371 = vmatprep.subr.mxu0 0.0
    %372 = vmatpush1.msra.mxu0 0.0
    %373 = vmatprep.subr.mxu0 0.0
    %374 = vmatpush1.msra.mxu0 0.0
    %375 = vmatprep.subr.mxu0 0.0
    %376 = vmatpush1.msra.mxu0 0.0
    %377 = vmatprep.subr.mxu0 0.0
    %378 = vmatpush1.msra.mxu0 0.0
    %379 = vmatprep.subr.mxu0 0.0
    %380 = vmatpush1.msra.mxu0 0.0
    %381 = vmatprep.subr.mxu0 0.0
    %382 = vmatpush1.msra.mxu0 0.0
    %383 = vmatprep.subr.mxu0 0.0
    %384 = vmatpush1.msra.mxu0 0.0
    %385 = vmatprep.subr.mxu0 0.0
    %386 = vmatpush1.msra.mxu0 0.0
    %387 = vmatprep.subr.mxu0 0.0
    %388 = vmatpush1.msra.mxu0 0.0
    %389 = vmatprep.subr.mxu0 0.0
    %390 = vmatpush1.msra.mxu0 0.0
    %391 = vmatprep.mubr.f32.mxu0 0.0
    %392 = vmatmul.mubr.f32.gmra.mrb[0].mxu0 %v303
    %v393 = vpop.f32.mrb[0].mxu0
    %v394 = vadd.f32 %v325, %v393
    %v395 = vpop.f32.mrb[0].mxu0
    %396 = vdwg.mxu0
    %397 = vst [vmem:[#allocation12] sm:$0x3] %v394
    // Predicated region
    $region50: #{tpu_custom_call.1} parent=1 // pred_check
      _
    $region51: #{tpu_custom_call.1} parent=1 // pred_check_branch
      %399 = sbr.rel (0) target = $region53
    $region52: #{tpu_custom_call.1} parent=1 // pred_region
      %s401 = ssub.s32 32, 32
      %402 = vsyncadd [#allocation5], %s401
      %s404 = sshll.u32 [#allocation11], 4
      %s405 = int_to_ptr.vmem [resolvable:$true] %s404
      %407 = dma.vmem_to_hbm [thread:$0]  %s405, 32, %s7, [#allocation5]
    $region53: #{tpu_custom_call.1} parent=1 // pred_fallthru
      _
    // Predicated region
    $region54: #{tpu_custom_call.1} parent=1 // pred_check
      _
    $region55: #{tpu_custom_call.1} parent=1 // pred_check_branch
      %409 = sbr.rel (0) target = $region57
    $region56: #{tpu_custom_call.1} parent=1 // pred_region
      %s411 = ssub.s32 32, 32
      %412 = vsyncadd [#allocation13], %s411
      %s414 = sshll.u32 [#allocation12], 4
      %s415 = int_to_ptr.vmem [resolvable:$true] %s414
      %417 = dma.vmem_to_hbm [thread:$0]  %s415, 32, %s8, [#allocation13]
    $region57: #{tpu_custom_call.1} parent=1 // pred_fallthru
      _
    // Predicated region
    $region58: #{tpu_custom_call.1} parent=1 // pred_check
      _
    $region59: #{tpu_custom_call.1} parent=1 // pred_check_branch
      %419 = sbr.rel (0) target = $region61
    $region60: #{tpu_custom_call.1} parent=1 // pred_region
      %420 = dma.done [#allocation5], 32
    $region61: #{tpu_custom_call.1} parent=1 // pred_fallthru
      _
    // Predicated region
    $region62: #{tpu_custom_call.1} parent=1 // pred_check
      _
    $region63: #{tpu_custom_call.1} parent=1 // pred_check_branch
      %422 = sbr.rel (0) target = $region65
    $region64: #{tpu_custom_call.1} parent=1 // pred_region
      %423 = dma.done [#allocation13], 32
    $region65: #{tpu_custom_call.1} parent=1 // pred_fallthru
      _
    %424 = vsyncpa [#allocation4], 1
    %425 = vsyncpa [#allocation7], 1
    %426 = vsyncpa [#allocation10], 1
    %427 = vsyncpa [#allocation5], 1
    %428 = vsyncpa [#allocation13], 1

</llo_original>
